<compile_context>
chip_gen: v5e
topology: v5e:2x2
jax: 0.10.0
libtpu: 0.0.40
codegen_flags: <defaults>
</compile_context>

<pallas_src>
import numpy as np
import jax
import jax.numpy as jnp
from jax.experimental import pallas as pl
from jax.experimental.pallas import tpu as pltpu


def _round_up(v, m):
    return ((v + m - 1) // m) * m


def _make_kernel(L, TL, hop, n_sub, carry_pad, needs_mask):
    """L: true #frames, TL: frames per tile (mult of 8), carry_pad: extra OA rows (mult of 8)."""
    acc_rows = TL + carry_pad

    def kernel(x_ref, wm_ref, bm_ref, wp_ref, bp_ref,
               cw_ref, dw_ref, ienv_ref, o_ref, acc_ref):
        li = pl.program_id(1)

        # Zero the resident per-batch overlap-add accumulator (the output block).
        @pl.when(li == 0)
        def _():
            o_ref[...] = jnp.zeros_like(o_ref)

        xv = x_ref[...]                                                # (TL, H) bf16

        # Linear head, split into magnitude / phase halves (bf16 MXU, f32 accumulate).
        hm = jnp.dot(xv, wm_ref[...], preferred_element_type=jnp.float32) + bm_ref[...]
        hp = jnp.dot(xv, wp_ref[...], preferred_element_type=jnp.float32) + bp_ref[...]

        mag = jnp.minimum(jnp.exp(hm), 100.0)                          # exp + clip(max=100)
        if needs_mask:
            # Zero the contribution of zero-padded tail frames (global frame idx >= L).
            row = jax.lax.broadcasted_iota(jnp.int32, (TL, 1), 0) + li * TL
            mag = jnp.where(row < L, mag, 0.0)

        re = (mag * jnp.cos(hp)).astype(jnp.bfloat16)                  # Re(S)
        im = (mag * jnp.sin(hp)).astype(jnp.bfloat16)                  # Im(S)

        # irfft(S, n_fft, norm="backward") with the Hann window folded into the bases.
        frames = (jnp.dot(re, cw_ref[...], preferred_element_type=jnp.float32)
                  + jnp.dot(im, dw_ref[...], preferred_element_type=jnp.float32))  # (TL, n_fft) f32

        # Overlap-add of this frame tile: static shifted adds into a small scratch
        # (pure data movement — no shift-matrix matmuls).
        acc_ref[...] = jnp.zeros_like(acc_ref)
        for j in range(n_sub):
            acc_ref[j:j + TL, :] += frames[:, j * hop:(j + 1) * hop]

        # Single 8-aligned dynamic-offset accumulate into the resident output block.
        start = pl.multiple_of(li * TL, 8)
        o_ref[pl.ds(start, acc_rows), :] += acc_ref[...]

        # Final tile: multiply by the precomputed reciprocal window envelope.
        @pl.when(li == pl.num_programs(1) - 1)
        def _():
            o_ref[...] = o_ref[...] * ienv_ref[...]

    return kernel


def istft_head_pallas(x, w, b, *, n_fft, hop_length, tile_frames=None):
    """x: (B, L, H) f32;  w: (H, n_fft+2) (== torch Linear weight.T);  b: (n_fft+2,)."""
    B, L, H = x.shape
    N = n_fft
    F = N // 2 + 1
    hop = hop_length
    assert N % hop == 0, "win_length must be an integer multiple of hop_length"
    n_sub = N // hop
    pad = (N - hop) // 2
    out_len = (L - 1) * hop + N
    n_slots = L + n_sub - 1                       # n_slots * hop == out_len

    # --- frame tiling (grid axis over L) ---
    if tile_frames is None:
        tile_frames = min(L, 256)                 # bounded VMEM, good pipelining at real L
    TL = max(8, _round_up(min(tile_frames, L), 8))
    n_li = pl.cdiv(L, TL)
    L_pad = n_li * TL
    carry_pad = _round_up(n_sub - 1, 8)           # 8-aligned overlap-add carry region
    n_slots_pad = L_pad + carry_pad

    f32, bf16 = jnp.float32, jnp.bfloat16

    # --- host-side constants (glue) ---
    w = w.astype(f32)
    b = b.astype(f32)
    w_mag = w[:, :F].astype(bf16)
    w_p = w[:, F:].astype(bf16)
    b_mag = b[:F].reshape(1, F)
    b_p = b[F:].reshape(1, F)

    # Real inverse-DFT bases (backward norm, C2R: imag of DC/Nyquist ignored), Hann folded in.
    k = jnp.arange(F, dtype=f32)[:, None]
    n = jnp.arange(N, dtype=f32)[None, :]
    ang = 2.0 * jnp.pi * k * n / N
    edge = (jnp.arange(F) == 0) | (jnp.arange(F) == N // 2)
    wk_c = jnp.where(edge, 1.0, 2.0).astype(f32)[:, None]
    wk_s = jnp.where(edge, 0.0, 2.0).astype(f32)[:, None]
    window = 0.5 * (1.0 - jnp.cos(2.0 * jnp.pi * jnp.arange(N, dtype=f32) / N))  # periodic Hann
    cw = ((wk_c / N) * jnp.cos(ang) * window[None, :]).astype(bf16)
    dw = (-(wk_s / N) * jnp.sin(ang) * window[None, :]).astype(bf16)

    # Reciprocal window envelope (single vectorised scatter-add; cropped region -> 1).
    idx = (jnp.arange(L)[:, None] * hop + jnp.arange(N)[None, :]).reshape(-1)
    env = jnp.zeros((out_len,), f32).at[idx].add(
        jnp.broadcast_to(window ** 2, (L, N)).reshape(-1))
    keep = (jnp.arange(out_len) >= pad) & (jnp.arange(out_len) < out_len - pad)
    inv_env = jnp.where(keep, 1.0 / env, 1.0)
    inv_env = jnp.concatenate(
        [inv_env, jnp.ones(((n_slots_pad - n_slots) * hop,), f32)]).reshape(n_slots_pad, hop)

    x_pad = jnp.pad(x.astype(f32), ((0, 0), (0, L_pad - L), (0, 0))).astype(bf16)

    kernel = _make_kernel(L, TL, hop, n_sub, carry_pad, L_pad != L)

    out_slots = pl.pallas_call(
        kernel,
        out_shape=jax.ShapeDtypeStruct((B, n_slots_pad, hop), f32),
        grid_spec=pltpu.PrefetchScalarGridSpec(
            num_scalar_prefetch=0,
            grid=(B, n_li),
            in_specs=[
                pl.BlockSpec((None, TL, H), lambda bb, li: (bb, li, 0)),      # x frame tile
                pl.BlockSpec((H, F), lambda bb, li: (0, 0)),                  # W_mag (bf16)
                pl.BlockSpec((1, F), lambda bb, li: (0, 0)),                  # b_mag
                pl.BlockSpec((H, F), lambda bb, li: (0, 0)),                  # W_phase (bf16)
                pl.BlockSpec((1, F), lambda bb, li: (0, 0)),                  # b_phase
                pl.BlockSpec((F, N), lambda bb, li: (0, 0)),                  # windowed cos basis
                pl.BlockSpec((F, N), lambda bb, li: (0, 0)),                  # windowed -sin basis
                pl.BlockSpec((n_slots_pad, hop), lambda bb, li: (0, 0)),      # 1 / envelope
            ],
            out_specs=pl.BlockSpec((None, n_slots_pad, hop), lambda bb, li: (bb, 0, 0)),
            scratch_shapes=[pltpu.VMEM((TL + carry_pad, hop), jnp.float32)],  # per-tile OA acc
        ),
        compiler_params=pltpu.CompilerParams(
            dimension_semantics=("parallel", "arbitrary"),
            vmem_limit_bytes=32 * 1024 * 1024,
        ),
    )(x_pad, w_mag, b_mag, w_p, b_p, cw, dw, inv_env)

    # Pure layout glue: slots -> flat signal, then crop `pad` samples from both ends.
    audio = out_slots.reshape(B, n_slots_pad * hop)[:, pad:n_slots * hop - pad]   # (B, L*hop)
    return audio


def istft_head_reference(x, w, b, *, n_fft, hop_length):
    """Pure-JAX re-implementation of the PyTorch forward (for validation)."""
    B, L, H = x.shape
    F = n_fft // 2 + 1
    h = jnp.einsum('blh,ho->bol', x, w) + b[None, :, None]             # (B, n_fft+2, L)
    mag = jnp.minimum(jnp.exp(h[:, :F, :]), 100.0)
    p = h[:, F:, :]
    S = mag * (jnp.cos(p) + 1j * jnp.sin(p))
    ifft = jnp.fft.irfft(S, n=n_fft, axis=1)                           # (B, n_fft, L)
    window = 0.5 * (1.0 - jnp.cos(2.0 * jnp.pi * jnp.arange(n_fft, dtype=jnp.float32) / n_fft))
    frames = (ifft * window[None, :, None]).transpose(0, 2, 1)         # (B, L, n_fft)
    out_len = (L - 1) * hop_length + n_fft
    idx = (jnp.arange(L)[:, None] * hop_length + jnp.arange(n_fft)[None, :]).reshape(-1)
    y = jnp.zeros((B, out_len), jnp.float32).at[:, idx].add(frames.reshape(B, -1))
    env = jnp.zeros((out_len,), jnp.float32).at[idx].add(
        jnp.broadcast_to(window ** 2, (L, n_fft)).reshape(-1))
    pad = (n_fft - hop_length) // 2
    return y[:, pad:out_len - pad] / env[pad:out_len - pad][None, :]


if __name__ == "__main__":
    # Small shapes consistent with ISTFTHead: (B, L, H) input, n_fft, hop_length.
    # L=12 with tile_frames=8 exercises multi-tile accumulation AND the tail-frame mask.
    B, L, H = 2, 12, 32
    n_fft, hop = 16, 4
    out_dim = n_fft + 2

    key = jax.random.PRNGKey(0)
    kx, kw, kb = jax.random.split(key, 3)
    x = jax.random.normal(kx, (B, L, H), jnp.float32)
    w = jax.random.normal(kw, (H, out_dim), jnp.float32) * 0.02   # torch Linear weight.T
    b = jax.random.normal(kb, (out_dim,), jnp.float32) * 0.01

    audio = istft_head_pallas(x, w, b, n_fft=n_fft, hop_length=hop, tile_frames=8)
    audio = jax.block_until_ready(audio)

    ref = jax.block_until_ready(istft_head_reference(x, w, b, n_fft=n_fft, hop_length=hop))

    assert audio.shape == (B, L * hop), f"bad output shape {audio.shape}"
    assert np.all(np.isfinite(np.asarray(audio))), "non-finite output"
    assert np.allclose(np.asarray(audio), np.asarray(ref), rtol=2e-2, atol=2e-2), \
        "mismatch vs pure-JAX reference"

    print("KERNEL_OK")
</pallas_src>

<mosaic_0001>
module attributes {stable_mosaic.version = 11 : i64} {
  func.func @kernel(%arg0: i32, %arg1: i32, %arg2: memref<1x8x32xbf16, #tpu.memory_space<vmem>>, %arg3: memref<32x9xbf16, #tpu.memory_space<vmem>>, %arg4: memref<1x9xf32, #tpu.memory_space<vmem>>, %arg5: memref<32x9xbf16, #tpu.memory_space<vmem>>, %arg6: memref<1x9xf32, #tpu.memory_space<vmem>>, %arg7: memref<9x16xbf16, #tpu.memory_space<vmem>>, %arg8: memref<9x16xbf16, #tpu.memory_space<vmem>>, %arg9: memref<24x4xf32, #tpu.memory_space<vmem>>, %arg10: memref<1x24x4xf32, #tpu.memory_space<vmem>>, %arg11: memref<16x4xf32, #tpu.memory_space<vmem>>) attributes {dimension_semantics = [#tpu.dimension_semantics<parallel>, #tpu.dimension_semantics<arbitrary>], iteration_bounds = array<i64: 2, 2>, scalar_prefetch = 0 : i64, scratch_operands = 1 : i64, tpu.core_type = #tpu.core_type<tc>, window_params = [{transform_indices = @transform_0, window_bounds = array<i64: 1, 8, 32>}, {pipeline_mode = #tpu.pipeline_mode<synchronous>, transform_indices = @transform_1, window_bounds = array<i64: 32, 9>}, {pipeline_mode = #tpu.pipeline_mode<synchronous>, transform_indices = @transform_2, window_bounds = array<i64: 1, 9>}, {pipeline_mode = #tpu.pipeline_mode<synchronous>, transform_indices = @transform_3, window_bounds = array<i64: 32, 9>}, {pipeline_mode = #tpu.pipeline_mode<synchronous>, transform_indices = @transform_4, window_bounds = array<i64: 1, 9>}, {pipeline_mode = #tpu.pipeline_mode<synchronous>, transform_indices = @transform_5, window_bounds = array<i64: 9, 16>}, {pipeline_mode = #tpu.pipeline_mode<synchronous>, transform_indices = @transform_6, window_bounds = array<i64: 9, 16>}, {pipeline_mode = #tpu.pipeline_mode<synchronous>, transform_indices = @transform_7, window_bounds = array<i64: 24, 4>}, {transform_indices = @transform_8, window_bounds = array<i64: 1, 24, 4>}]} {
    %c0_i32 = arith.constant 0 : i32
    %0 = arith.cmpi eq, %arg1, %c0_i32 : i32
    %1 = arith.extui %0 : i1 to i32
    %c0_i32_0 = arith.constant 0 : i32
    %2 = arith.cmpi ne, %1, %c0_i32_0 : i32
    scf.if %2 {
      %cst_44 = arith.constant 0.000000e+00 : f32
      %71 = vector.broadcast %cst_44 : f32 to vector<24x4xf32>
      %c0_45 = arith.constant 0 : index
      %c0_46 = arith.constant 0 : index
      %c0_47 = arith.constant 0 : index
      %72 = vector.load %arg10[%c0_45, %c0_46, %c0_47] : memref<1x24x4xf32, #tpu.memory_space<vmem>>, vector<1x24x4xf32>
      %73 = vector.shape_cast %72 : vector<1x24x4xf32> to vector<24x4xf32>
      %74 = vector.shape_cast %71 : vector<24x4xf32> to vector<1x24x4xf32>
      tpu.vector_store %arg10[%c0_45, %c0_46, %c0_47], %74 {strides = array<i32>} : memref<1x24x4xf32, #tpu.memory_space<vmem>>, vector<1x24x4xf32>,
    } else {
    }
    %c0 = arith.constant 0 : index
    %c0_1 = arith.constant 0 : index
    %c0_2 = arith.constant 0 : index
    %3 = vector.load %arg2[%c0, %c0_1, %c0_2] : memref<1x8x32xbf16, #tpu.memory_space<vmem>>, vector<1x8x32xbf16>
    %4 = vector.shape_cast %3 : vector<1x8x32xbf16> to vector<8x32xbf16>
    %c0_3 = arith.constant 0 : index
    %c0_4 = arith.constant 0 : index
    %5 = vector.load %arg3[%c0_3, %c0_4] : memref<32x9xbf16, #tpu.memory_space<vmem>>, vector<32x9xbf16>
    %cst = arith.constant dense<0.000000e+00> : vector<8x9xf32>
    %6 = tpu.matmul %4, %5, %cst {dimension_numbers = #tpu.dot_dimension_numbers<[1], [0], [0], [1], [0, 0, 1, 1], [], []>} : vector<8x32xbf16>, vector<32x9xbf16>, vector<8x9xf32> -> vector<8x9xf32>
    %c0_5 = arith.constant 0 : index
    %c0_6 = arith.constant 0 : index
    %7 = vector.load %arg4[%c0_5, %c0_6] : memref<1x9xf32, #tpu.memory_space<vmem>>, vector<1x9xf32>
    %8 = vector.broadcast %7 : vector<1x9xf32> to vector<8x9xf32>
    %9 = arith.addf %6, %8 : vector<8x9xf32>
    %c0_7 = arith.constant 0 : index
    %c0_8 = arith.constant 0 : index
    %10 = vector.load %arg5[%c0_7, %c0_8] : memref<32x9xbf16, #tpu.memory_space<vmem>>, vector<32x9xbf16>
    %cst_9 = arith.constant dense<0.000000e+00> : vector<8x9xf32>
    %11 = tpu.matmul %4, %10, %cst_9 {dimension_numbers = #tpu.dot_dimension_numbers<[1], [0], [0], [1], [0, 0, 1, 1], [], []>} : vector<8x32xbf16>, vector<32x9xbf16>, vector<8x9xf32> -> vector<8x9xf32>
    %c0_10 = arith.constant 0 : index
    %c0_11 = arith.constant 0 : index
    %12 = vector.load %arg6[%c0_10, %c0_11] : memref<1x9xf32, #tpu.memory_space<vmem>>, vector<1x9xf32>
    %13 = vector.broadcast %12 : vector<1x9xf32> to vector<8x9xf32>
    %14 = arith.addf %11, %13 : vector<8x9xf32>
    %15 = math.exp %9 : vector<8x9xf32>
    %cst_12 = arith.constant 1.000000e+02 : f32
    %16 = vector.broadcast %cst_12 : f32 to vector<8x9xf32>
    %17 = arith.minimumf %15, %16 : vector<8x9xf32>
    %18 = tpu.iota {dimensions = array<i32: 0>} : vector<8x1xi32>
    %c8_i32 = arith.constant 8 : i32
    %19 = arith.muli %arg1, %c8_i32 : i32
    %20 = vector.broadcast %19 : i32 to vector<8x1xi32>
    %21 = arith.addi %18, %20 : vector<8x1xi32>
    %c12_i32 = arith.constant 12 : i32
    %22 = vector.broadcast %c12_i32 : i32 to vector<8x1xi32>
    %23 = arith.cmpi slt, %21, %22 : vector<8x1xi32>
    %cst_13 = arith.constant 0.000000e+00 : f32
    %24 = vector.shape_cast %23 : vector<8x1xi1> to vector<8x1xi1>
    %25 = vector.broadcast %24 : vector<8x1xi1> to vector<8x9xi1>
    %26 = vector.broadcast %cst_13 : f32 to vector<8x9xf32>
    %27 = arith.select %25, %17, %26 : vector<8x9xi1>, vector<8x9xf32>
    %28 = math.cos %14 : vector<8x9xf32>
    %29 = arith.mulf %27, %28 : vector<8x9xf32>
    %30 = arith.truncf %29 : vector<8x9xf32> to vector<8x9xbf16>
    %31 = math.sin %14 : vector<8x9xf32>
    %32 = arith.mulf %27, %31 : vector<8x9xf32>
    %33 = arith.truncf %32 : vector<8x9xf32> to vector<8x9xbf16>
    %c0_14 = arith.constant 0 : index
    %c0_15 = arith.constant 0 : index
    %34 = vector.load %arg7[%c0_14, %c0_15] : memref<9x16xbf16, #tpu.memory_space<vmem>>, vector<9x16xbf16>
    %cst_16 = arith.constant dense<0.000000e+00> : vector<8x16xf32>
    %35 = tpu.matmul %30, %34, %cst_16 {dimension_numbers = #tpu.dot_dimension_numbers<[1], [0], [0], [1], [0, 0, 1, 1], [], []>} : vector<8x9xbf16>, vector<9x16xbf16>, vector<8x16xf32> -> vector<8x16xf32>
    %c0_17 = arith.constant 0 : index
    %c0_18 = arith.constant 0 : index
    %36 = vector.load %arg8[%c0_17, %c0_18] : memref<9x16xbf16, #tpu.memory_space<vmem>>, vector<9x16xbf16>
    %cst_19 = arith.constant dense<0.000000e+00> : vector<8x16xf32>
    %37 = tpu.matmul %33, %36, %cst_19 {dimension_numbers = #tpu.dot_dimension_numbers<[1], [0], [0], [1], [0, 0, 1, 1], [], []>} : vector<8x9xbf16>, vector<9x16xbf16>, vector<8x16xf32> -> vector<8x16xf32>
    %38 = arith.addf %35, %37 : vector<8x16xf32>
    %cst_20 = arith.constant 0.000000e+00 : f32
    %39 = vector.broadcast %cst_20 : f32 to vector<16x4xf32>
    %c0_21 = arith.constant 0 : index
    %c0_22 = arith.constant 0 : index
    %40 = vector.load %arg11[%c0_21, %c0_22] : memref<16x4xf32, #tpu.memory_space<vmem>>, vector<16x4xf32>
    tpu.vector_store %arg11[%c0_21, %c0_22], %39 {strides = array<i32>} : memref<16x4xf32, #tpu.memory_space<vmem>>, vector<16x4xf32>,
    %c0_23 = arith.constant 0 : index
    %c0_24 = arith.constant 0 : index
    %41 = vector.load %arg11[%c0_23, %c0_24] : memref<16x4xf32, #tpu.memory_space<vmem>>, vector<8x4xf32>
    %42 = vector.extract_strided_slice %38 {offsets = [0, 0], sizes = [8, 4], strides = [1, 1]} : vector<8x16xf32> to vector<8x4xf32>
    %43 = arith.addf %41, %42 : vector<8x4xf32>
    %c0_25 = arith.constant 0 : index
    %c0_26 = arith.constant 0 : index
    %44 = vector.load %arg11[%c0_25, %c0_26] : memref<16x4xf32, #tpu.memory_space<vmem>>, vector<8x4xf32>
    tpu.vector_store %arg11[%c0_25, %c0_26], %43 {strides = array<i32>} : memref<16x4xf32, #tpu.memory_space<vmem>>, vector<8x4xf32>,
    %c1 = arith.constant 1 : index
    %c0_27 = arith.constant 0 : index
    %45 = vector.load %arg11[%c1, %c0_27] : memref<16x4xf32, #tpu.memory_space<vmem>>, vector<8x4xf32>
    %46 = vector.extract_strided_slice %38 {offsets = [0, 4], sizes = [8, 4], strides = [1, 1]} : vector<8x16xf32> to vector<8x4xf32>
    %47 = arith.addf %45, %46 : vector<8x4xf32>
    %c1_28 = arith.constant 1 : index
    %c0_29 = arith.constant 0 : index
    %48 = vector.load %arg11[%c1_28, %c0_29] : memref<16x4xf32, #tpu.memory_space<vmem>>, vector<8x4xf32>
    tpu.vector_store %arg11[%c1_28, %c0_29], %47 {strides = array<i32>} : memref<16x4xf32, #tpu.memory_space<vmem>>, vector<8x4xf32>,
    %c2 = arith.constant 2 : index
    %c0_30 = arith.constant 0 : index
    %49 = vector.load %arg11[%c2, %c0_30] : memref<16x4xf32, #tpu.memory_space<vmem>>, vector<8x4xf32>
    %50 = vector.extract_strided_slice %38 {offsets = [0, 8], sizes = [8, 4], strides = [1, 1]} : vector<8x16xf32> to vector<8x4xf32>
    %51 = arith.addf %49, %50 : vector<8x4xf32>
    %c2_31 = arith.constant 2 : index
    %c0_32 = arith.constant 0 : index
    %52 = vector.load %arg11[%c2_31, %c0_32] : memref<16x4xf32, #tpu.memory_space<vmem>>, vector<8x4xf32>
    tpu.vector_store %arg11[%c2_31, %c0_32], %51 {strides = array<i32>} : memref<16x4xf32, #tpu.memory_space<vmem>>, vector<8x4xf32>,
    %c3 = arith.constant 3 : index
    %c0_33 = arith.constant 0 : index
    %53 = vector.load %arg11[%c3, %c0_33] : memref<16x4xf32, #tpu.memory_space<vmem>>, vector<8x4xf32>
    %54 = vector.extract_strided_slice %38 {offsets = [0, 12], sizes = [8, 4], strides = [1, 1]} : vector<8x16xf32> to vector<8x4xf32>
    %55 = arith.addf %53, %54 : vector<8x4xf32>
    %c3_34 = arith.constant 3 : index
    %c0_35 = arith.constant 0 : index
    %56 = vector.load %arg11[%c3_34, %c0_35] : memref<16x4xf32, #tpu.memory_space<vmem>>, vector<8x4xf32>
    tpu.vector_store %arg11[%c3_34, %c0_35], %55 {strides = array<i32>} : memref<16x4xf32, #tpu.memory_space<vmem>>, vector<8x4xf32>,
    %c8_i32_36 = arith.constant 8 : i32
    %57 = arith.muli %arg1, %c8_i32_36 : i32
    %58 = tpu.assume_multiple %57, 8 : i32
    %c0_37 = arith.constant 0 : index
    %59 = arith.index_cast %58 : i32 to index
    %c0_38 = arith.constant 0 : index
    %60 = vector.load %arg10[%c0_37, %59, %c0_38] : memref<1x24x4xf32, #tpu.memory_space<vmem>>, vector<1x16x4xf32>
    %61 = vector.shape_cast %60 : vector<1x16x4xf32> to vector<16x4xf32>
    %c0_39 = arith.constant 0 : index
    %c0_40 = arith.constant 0 : index
    %62 = vector.load %arg11[%c0_39, %c0_40] : memref<16x4xf32, #tpu.memory_space<vmem>>, vector<16x4xf32>
    %63 = arith.addf %61, %62 : vector<16x4xf32>
    %c0_41 = arith.constant 0 : index
    %64 = arith.index_cast %58 : i32 to index
    %c0_42 = arith.constant 0 : index
    %65 = vector.load %arg10[%c0_41, %64, %c0_42] : memref<1x24x4xf32, #tpu.memory_space<vmem>>, vector<1x16x4xf32>
    %66 = vector.shape_cast %65 : vector<1x16x4xf32> to vector<16x4xf32>
    %67 = vector.shape_cast %63 : vector<16x4xf32> to vector<1x16x4xf32>
    tpu.vector_store %arg10[%c0_41, %64, %c0_42], %67 {strides = array<i32>} : memref<1x24x4xf32, #tpu.memory_space<vmem>>, vector<1x16x4xf32>,
    %c1_i32 = arith.constant 1 : i32
    %68 = arith.cmpi eq, %arg1, %c1_i32 : i32
    %69 = arith.extui %68 : i1 to i32
    %c0_i32_43 = arith.constant 0 : i32
    %70 = arith.cmpi ne, %69, %c0_i32_43 : i32
    scf.if %70 {
      %c0_44 = arith.constant 0 : index
      %c0_45 = arith.constant 0 : index
      %c0_46 = arith.constant 0 : index
      %71 = vector.load %arg10[%c0_44, %c0_45, %c0_46] : memref<1x24x4xf32, #tpu.memory_space<vmem>>, vector<1x24x4xf32>
      %72 = vector.shape_cast %71 : vector<1x24x4xf32> to vector<24x4xf32>
      %c0_47 = arith.constant 0 : index
      %c0_48 = arith.constant 0 : index
      %73 = vector.load %arg9[%c0_47, %c0_48] : memref<24x4xf32, #tpu.memory_space<vmem>>, vector<24x4xf32>
      %74 = arith.mulf %72, %73 : vector<24x4xf32>
      %c0_49 = arith.constant 0 : index
      %c0_50 = arith.constant 0 : index
      %c0_51 = arith.constant 0 : index
      %75 = vector.load %arg10[%c0_49, %c0_50, %c0_51] : memref<1x24x4xf32, #tpu.memory_space<vmem>>, vector<1x24x4xf32>
      %76 = vector.shape_cast %75 : vector<1x24x4xf32> to vector<24x4xf32>
      %77 = vector.shape_cast %74 : vector<24x4xf32> to vector<1x24x4xf32>
      tpu.vector_store %arg10[%c0_49, %c0_50, %c0_51], %77 {strides = array<i32>} : memref<1x24x4xf32, #tpu.memory_space<vmem>>, vector<1x24x4xf32>,
    } else {
    }
    return
  }
  func.func @transform_0(%arg0: i32, %arg1: i32) -> (i32, i32, i32) {
    %c0_i32 = arith.constant 0 : i32
    %c0_i32_0 = arith.constant 0 : i32
    return %arg0, %arg1, %c0_i32 : i32, i32, i32
  }
  func.func @transform_1(%arg0: i32, %arg1: i32) -> (i32, i32) {
    %c0_i32 = arith.constant 0 : i32
    %c0_i32_0 = arith.constant 0 : i32
    %c0_i32_1 = arith.constant 0 : i32
    return %c0_i32, %c0_i32_0 : i32, i32
  }
  func.func @transform_2(%arg0: i32, %arg1: i32) -> (i32, i32) {
    %c0_i32 = arith.constant 0 : i32
    %c0_i32_0 = arith.constant 0 : i32
    %c0_i32_1 = arith.constant 0 : i32
    return %c0_i32, %c0_i32_0 : i32, i32
  }
  func.func @transform_3(%arg0: i32, %arg1: i32) -> (i32, i32) {
    %c0_i32 = arith.constant 0 : i32
    %c0_i32_0 = arith.constant 0 : i32
    %c0_i32_1 = arith.constant 0 : i32
    return %c0_i32, %c0_i32_0 : i32, i32
  }
  func.func @transform_4(%arg0: i32, %arg1: i32) -> (i32, i32) {
    %c0_i32 = arith.constant 0 : i32
    %c0_i32_0 = arith.constant 0 : i32
    %c0_i32_1 = arith.constant 0 : i32
    return %c0_i32, %c0_i32_0 : i32, i32
  }
  func.func @transform_5(%arg0: i32, %arg1: i32) -> (i32, i32) {
    %c0_i32 = arith.constant 0 : i32
    %c0_i32_0 = arith.constant 0 : i32
    %c0_i32_1 = arith.constant 0 : i32
    return %c0_i32, %c0_i32_0 : i32, i32
  }
  func.func @transform_6(%arg0: i32, %arg1: i32) -> (i32, i32) {
    %c0_i32 = arith.constant 0 : i32
    %c0_i32_0 = arith.constant 0 : i32
    %c0_i32_1 = arith.constant 0 : i32
    return %c0_i32, %c0_i32_0 : i32, i32
  }
  func.func @transform_7(%arg0: i32, %arg1: i32) -> (i32, i32) {
    %c0_i32 = arith.constant 0 : i32
    %c0_i32_0 = arith.constant 0 : i32
    %c0_i32_1 = arith.constant 0 : i32
    return %c0_i32, %c0_i32_0 : i32, i32
  }
  func.func @transform_8(%arg0: i32, %arg1: i32) -> (i32, i32, i32) {
    %c0_i32 = arith.constant 0 : i32
    %c0_i32_0 = arith.constant 0 : i32
    %c0_i32_1 = arith.constant 0 : i32
    return %arg0, %c0_i32, %c0_i32_0 : i32, i32, i32
  }
}

</mosaic_0001>

<llo_original>
// kernel: tpu_custom_call.1
$region0: #{tpu_custom_call.1}
  #allocation0 [shape = 'u32[]', space=smem, size = 0x4, offset = 0x4, fixed_abs, tag = 'smem constant byte address 0x4 - core index']
  #allocation1 [shape = 'u32[72,128]{1,0:T(1,128)}', space=vmem, size = 0x9000, scoped, tag = 'internal scratch']
  #allocation2 [shape = 'f32[16,4]{1,0:T(8,128)}', space=vmem, size = 0x2000, scoped, tag = 'scratch operand']
  %s0 = inlined_call_operand.vmem [shape: bf16[2,16,32], index: 0, kind: input, shape index: {}]
  %s1 = inlined_call_operand.vmem [shape: bf16[32,9], index: 1, kind: input, shape index: {}]
  %s2 = inlined_call_operand.vmem [shape: f32[1,9], index: 2, kind: input, shape index: {}]
  %s3 = inlined_call_operand.vmem [shape: bf16[32,9], index: 3, kind: input, shape index: {}]
  %s4 = inlined_call_operand.vmem [shape: f32[1,9], index: 4, kind: input, shape index: {}]
  %s5 = inlined_call_operand.vmem [shape: bf16[9,16], index: 5, kind: input, shape index: {}]
  %s6 = inlined_call_operand.vmem [shape: bf16[9,16], index: 6, kind: input, shape index: {}]
  %s7 = inlined_call_operand.vmem [shape: f32[24,4], index: 7, kind: input, shape index: {}]
  %s8 = inlined_call_operand.vmem [shape: f32[2,24,4], index: 8, kind: output, shape index: {}]
  %s9 = sld [smem:[#allocation0]]
  $region73: #{tpu_custom_call.1} parent=0
    _
  %s11 = ssub.s32 1, %s9
  %s12 = scalar_select 0, %s11, %s9
  loop: start=0, step=1, limit=6
  $region2: #{tpu_custom_call.1} parent=0 // loop_pre_header
    _
  $region3: #{tpu_custom_call.1} parent=0 // loop_header
    %s14 = sphi 0, %s18
    %p15 = scmp.ge.s32.totalorder %s14, 6
    %s21 = sphi 0, %s33
    %s22 = sphi 0, %s29
    %s23 = sphi 0, %s21
    %s24 = sphi 0, %s22
    %s25 = sphi 0, %s23
    %s26 = sphi 0, %s24
    %s38 = sphi 0, %s40
    %s41 = sphi 0, %s38
    %s42 = sphi 0, %s41
    %s58 = sphi 0, %s42
    %s62 = sphi 0, %s62
    %s64 = sphi 0, %s62
    %s65 = sphi 0, %s64
    %s79 = sphi 0, %s65
    %s83 = sphi 0, %s83
    %s85 = sphi 0, %s83
    %s86 = sphi 0, %s85
    %s100 = sphi 0, %s86
    %s104 = sphi 0, %s104
    %s106 = sphi 0, %s104
    %s107 = sphi 0, %s106
    %s121 = sphi 0, %s107
    %s125 = sphi 0, %s125
    %s127 = sphi 0, %s125
    %s128 = sphi 0, %s127
    %s142 = sphi 0, %s128
    %s146 = sphi 0, %s146
    %s148 = sphi 0, %s146
    %s149 = sphi 0, %s148
    %s163 = sphi 0, %s149
    %s167 = sphi 0, %s167
    %s169 = sphi 0, %s167
    %s170 = sphi 0, %s169
    %s184 = sphi 0, %s170
    %s188 = sphi 0, %s188
    %s190 = sphi 0, %s188
    %s191 = sphi 0, %s190
    %s205 = sphi 0, %s191
    %s211 = sphi 0, %s213
    %s214 = sphi 0, %s211
    %s215 = sphi 0, %s214
    %s231 = sphi 0, %s215
  $region4: #{tpu_custom_call.1} parent=0 // loop_header_branch
    %17 = sbr.rel (%p15) target = $region8
  $region5: #{tpu_custom_call.1} parent=0 // loop_body
    %s19 = ssub.s32 %s14, 1
    %s20 = ssub.s32 %s14, 2
    %s27 = sadd.s32 1, %s22
    %p28 = scmp.ge.s32.totalorder %s27, 2
    %s29 = scalar_select %p28, 0, %s27
    %s30 = sadd.s32 1, %s21
    %s31 = scalar_select %p28, %s30, %s21
    %p32 = scmp.ge.s32.totalorder %s31, 2
    %s33 = scalar_select %p32, 0, %s31
    %s34 = ssub.s32 %s21, %s33
    %s35 = ssub.s32 %s22, %s29
    %s36 = sor.u32 %s34, %s35
    %p37 = scmp.eq.s32.totalorder %s36, 0
    %s39 = sadd.s32 %s38, 1
    %s40 = scalar_select %p37, %s38, %s39
    %p43 = pneg %p37
    %p44 = scmp.eq.s32.totalorder %s14, 3
    %p45 = por %p43, %p44
    %p46 = scmp.ne.s32.totalorder %s38, %s41
    %p47 = scmp.eq.s32.totalorder %s14, 0
    %p48 = por %p46, %p47
    %p49 = scmp.ne.s32.totalorder %s38, %s41
    %p50 = scmp.eq.s32.totalorder %s19, 3
    %p51 = por %p49, %p50
    %p52 = scmp.ne.s32.totalorder %s41, %s42
    %p53 = scmp.eq.s32.totalorder %s19, 0
    %p54 = por %p52, %p53
    %p55 = scmp.ne.s32.totalorder %s41, %s42
    %p56 = scmp.eq.s32.totalorder %s20, 3
    %p57 = por %p55, %p56
    %p59 = scmp.ne.s32.totalorder %s42, %s58
    %p60 = scmp.eq.s32.totalorder %s20, 0
    %p61 = por %p59, %p60
    %s63 = sadd.s32 %s62, 1
    %p66 = scmp.eq.s32.totalorder %s14, 3
    %p67 = scmp.ne.s32.totalorder %s62, %s64
    %p68 = scmp.eq.s32.totalorder %s14, 0
    %p69 = por %p67, %p68
    %p70 = scmp.ne.s32.totalorder %s62, %s64
    %p71 = scmp.eq.s32.totalorder %s19, 3
    %p72 = por %p70, %p71
    %p73 = scmp.ne.s32.totalorder %s64, %s65
    %p74 = scmp.eq.s32.totalorder %s19, 0
    %p75 = por %p73, %p74
    %p76 = scmp.ne.s32.totalorder %s64, %s65
    %p77 = scmp.eq.s32.totalorder %s20, 3
    %p78 = por %p76, %p77
    %p80 = scmp.ne.s32.totalorder %s65, %s79
    %p81 = scmp.eq.s32.totalorder %s20, 0
    %p82 = por %p80, %p81
    %s84 = sadd.s32 %s83, 1
    %p87 = scmp.eq.s32.totalorder %s14, 3
    %p88 = scmp.ne.s32.totalorder %s83, %s85
    %p89 = scmp.eq.s32.totalorder %s14, 0
    %p90 = por %p88, %p89
    %p91 = scmp.ne.s32.totalorder %s83, %s85
    %p92 = scmp.eq.s32.totalorder %s19, 3
    %p93 = por %p91, %p92
    %p94 = scmp.ne.s32.totalorder %s85, %s86
    %p95 = scmp.eq.s32.totalorder %s19, 0
    %p96 = por %p94, %p95
    %p97 = scmp.ne.s32.totalorder %s85, %s86
    %p98 = scmp.eq.s32.totalorder %s20, 3
    %p99 = por %p97, %p98
    %p101 = scmp.ne.s32.totalorder %s86, %s100
    %p102 = scmp.eq.s32.totalorder %s20, 0
    %p103 = por %p101, %p102
    %s105 = sadd.s32 %s104, 1
    %p108 = scmp.eq.s32.totalorder %s14, 3
    %p109 = scmp.ne.s32.totalorder %s104, %s106
    %p110 = scmp.eq.s32.totalorder %s14, 0
    %p111 = por %p109, %p110
    %p112 = scmp.ne.s32.totalorder %s104, %s106
    %p113 = scmp.eq.s32.totalorder %s19, 3
    %p114 = por %p112, %p113
    %p115 = scmp.ne.s32.totalorder %s106, %s107
    %p116 = scmp.eq.s32.totalorder %s19, 0
    %p117 = por %p115, %p116
    %p118 = scmp.ne.s32.totalorder %s106, %s107
    %p119 = scmp.eq.s32.totalorder %s20, 3
    %p120 = por %p118, %p119
    %p122 = scmp.ne.s32.totalorder %s107, %s121
    %p123 = scmp.eq.s32.totalorder %s20, 0
    %p124 = por %p122, %p123
    %s126 = sadd.s32 %s125, 1
    %p129 = scmp.eq.s32.totalorder %s14, 3
    %p130 = scmp.ne.s32.totalorder %s125, %s127
    %p131 = scmp.eq.s32.totalorder %s14, 0
    %p132 = por %p130, %p131
    %p133 = scmp.ne.s32.totalorder %s125, %s127
    %p134 = scmp.eq.s32.totalorder %s19, 3
    %p135 = por %p133, %p134
    %p136 = scmp.ne.s32.totalorder %s127, %s128
    %p137 = scmp.eq.s32.totalorder %s19, 0
    %p138 = por %p136, %p137
    %p139 = scmp.ne.s32.totalorder %s127, %s128
    %p140 = scmp.eq.s32.totalorder %s20, 3
    %p141 = por %p139, %p140
    %p143 = scmp.ne.s32.totalorder %s128, %s142
    %p144 = scmp.eq.s32.totalorder %s20, 0
    %p145 = por %p143, %p144
    %s147 = sadd.s32 %s146, 1
    %p150 = scmp.eq.s32.totalorder %s14, 3
    %p151 = scmp.ne.s32.totalorder %s146, %s148
    %p152 = scmp.eq.s32.totalorder %s14, 0
    %p153 = por %p151, %p152
    %p154 = scmp.ne.s32.totalorder %s146, %s148
    %p155 = scmp.eq.s32.totalorder %s19, 3
    %p156 = por %p154, %p155
    %p157 = scmp.ne.s32.totalorder %s148, %s149
    %p158 = scmp.eq.s32.totalorder %s19, 0
    %p159 = por %p157, %p158
    %p160 = scmp.ne.s32.totalorder %s148, %s149
    %p161 = scmp.eq.s32.totalorder %s20, 3
    %p162 = por %p160, %p161
    %p164 = scmp.ne.s32.totalorder %s149, %s163
    %p165 = scmp.eq.s32.totalorder %s20, 0
    %p166 = por %p164, %p165
    %s168 = sadd.s32 %s167, 1
    %p171 = scmp.eq.s32.totalorder %s14, 3
    %p172 = scmp.ne.s32.totalorder %s167, %s169
    %p173 = scmp.eq.s32.totalorder %s14, 0
    %p174 = por %p172, %p173
    %p175 = scmp.ne.s32.totalorder %s167, %s169
    %p176 = scmp.eq.s32.totalorder %s19, 3
    %p177 = por %p175, %p176
    %p178 = scmp.ne.s32.totalorder %s169, %s170
    %p179 = scmp.eq.s32.totalorder %s19, 0
    %p180 = por %p178, %p179
    %p181 = scmp.ne.s32.totalorder %s169, %s170
    %p182 = scmp.eq.s32.totalorder %s20, 3
    %p183 = por %p181, %p182
    %p185 = scmp.ne.s32.totalorder %s170, %s184
    %p186 = scmp.eq.s32.totalorder %s20, 0
    %p187 = por %p185, %p186
    %s189 = sadd.s32 %s188, 1
    %p192 = scmp.eq.s32.totalorder %s14, 3
    %p193 = scmp.ne.s32.totalorder %s188, %s190
    %p194 = scmp.eq.s32.totalorder %s14, 0
    %p195 = por %p193, %p194
    %p196 = scmp.ne.s32.totalorder %s188, %s190
    %p197 = scmp.eq.s32.totalorder %s19, 3
    %p198 = por %p196, %p197
    %p199 = scmp.ne.s32.totalorder %s190, %s191
    %p200 = scmp.eq.s32.totalorder %s19, 0
    %p201 = por %p199, %p200
    %p202 = scmp.ne.s32.totalorder %s190, %s191
    %p203 = scmp.eq.s32.totalorder %s20, 3
    %p204 = por %p202, %p203
    %p206 = scmp.ne.s32.totalorder %s191, %s205
    %p207 = scmp.eq.s32.totalorder %s20, 0
    %p208 = por %p206, %p207
    %s209 = ssub.s32 %s21, %s33
    %p210 = scmp.eq.s32.totalorder %s209, 0
    %s212 = sadd.s32 %s211, 1
    %s213 = scalar_select %p210, %s211, %s212
    %p216 = pneg %p210
    %p217 = scmp.eq.s32.totalorder %s14, 3
    %p218 = por %p216, %p217
    %p219 = scmp.ne.s32.totalorder %s211, %s214
    %p220 = scmp.eq.s32.totalorder %s14, 0
    %p221 = por %p219, %p220
    %p222 = scmp.ne.s32.totalorder %s211, %s214
    %p223 = scmp.eq.s32.totalorder %s19, 3
    %p224 = por %p222, %p223
    %p225 = scmp.ne.s32.totalorder %s214, %s215
    %p226 = scmp.eq.s32.totalorder %s19, 0
    %p227 = por %p225, %p226
    %p228 = scmp.ne.s32.totalorder %s214, %s215
    %p229 = scmp.eq.s32.totalorder %s20, 3
    %p230 = por %p228, %p229
    %p232 = scmp.ne.s32.totalorder %s215, %s231
    %p233 = scmp.eq.s32.totalorder %s20, 0
    %p234 = por %p232, %p233
    %p235 = scmp.le.s32.totalorder 1, %s14
    %p236 = scmp.lt.s32.totalorder %s14, 5
    %p237 = pnand %p235, %p236
    %p238 = pneg %p237
    // Predicated region
    $region9: #{tpu_custom_call.1} parent=5 // pred_check
      _
    $region10: #{tpu_custom_call.1} parent=5 // pred_check_branch
      %240 = sbr.rel (%p237) target = $region12
    $region11: #{tpu_custom_call.1} parent=5 // pred_region
      %s241 = ssub.s32 %s14, 1
      // Predicated region
      $region13: #{tpu_custom_call.1} parent=11 // pred_check
        %p242 = pneg %p75
      $region14: #{tpu_custom_call.1} parent=11 // pred_check_branch
        %244 = sbr.rel (%p242) target = $region16
      $region15: #{tpu_custom_call.1} parent=11 // pred_region
        _
      $region16: #{tpu_custom_call.1} parent=11 // pred_fallthru
        _
      // Predicated region
      $region17: #{tpu_custom_call.1} parent=11 // pred_check
        %p245 = pneg %p96
      $region18: #{tpu_custom_call.1} parent=11 // pred_check_branch
        %247 = sbr.rel (%p245) target = $region20
      $region19: #{tpu_custom_call.1} parent=11 // pred_region
        _
      $region20: #{tpu_custom_call.1} parent=11 // pred_fallthru
        _
      // Predicated region
      $region21: #{tpu_custom_call.1} parent=11 // pred_check
        %p248 = pneg %p117
      $region22: #{tpu_custom_call.1} parent=11 // pred_check_branch
        %250 = sbr.rel (%p248) target = $region24
      $region23: #{tpu_custom_call.1} parent=11 // pred_region
        _
      $region24: #{tpu_custom_call.1} parent=11 // pred_fallthru
        _
      // Predicated region
      $region25: #{tpu_custom_call.1} parent=11 // pred_check
        %p251 = pneg %p138
      $region26: #{tpu_custom_call.1} parent=11 // pred_check_branch
        %253 = sbr.rel (%p251) target = $region28
      $region27: #{tpu_custom_call.1} parent=11 // pred_region
        _
      $region28: #{tpu_custom_call.1} parent=11 // pred_fallthru
        _
      // Predicated region
      $region29: #{tpu_custom_call.1} parent=11 // pred_check
        %p254 = pneg %p159
      $region30: #{tpu_custom_call.1} parent=11 // pred_check_branch
        %256 = sbr.rel (%p254) target = $region32
      $region31: #{tpu_custom_call.1} parent=11 // pred_region
        _
      $region32: #{tpu_custom_call.1} parent=11 // pred_fallthru
        _
      // Predicated region
      $region33: #{tpu_custom_call.1} parent=11 // pred_check
        %p257 = pneg %p180
      $region34: #{tpu_custom_call.1} parent=11 // pred_check_branch
        %259 = sbr.rel (%p257) target = $region36
      $region35: #{tpu_custom_call.1} parent=11 // pred_region
        _
      $region36: #{tpu_custom_call.1} parent=11 // pred_fallthru
        _
      // Predicated region
      $region37: #{tpu_custom_call.1} parent=11 // pred_check
        %p260 = pneg %p201
      $region38: #{tpu_custom_call.1} parent=11 // pred_check_branch
        %262 = sbr.rel (%p260) target = $region40
      $region39: #{tpu_custom_call.1} parent=11 // pred_region
        _
      $region40: #{tpu_custom_call.1} parent=11 // pred_fallthru
        _
    $region12: #{tpu_custom_call.1} parent=5 // pred_fallthru
      _
    %p263 = scmp.lt.s32.totalorder %s14, 4
    // Predicated region
    $region41: #{tpu_custom_call.1} parent=5 // pred_check
      %p264 = pneg %p263
    $region42: #{tpu_custom_call.1} parent=5 // pred_check_branch
      %266 = sbr.rel (%p264) target = $region44
    $region43: #{tpu_custom_call.1} parent=5 // pred_region
      // Predicated region
      $region45: #{tpu_custom_call.1} parent=43 // pred_check
        %p267 = pneg %p48
      $region46: #{tpu_custom_call.1} parent=43 // pred_check_branch
        %269 = sbr.rel (%p267) target = $region48
      $region47: #{tpu_custom_call.1} parent=43 // pred_region
        %p270 = scmp.lt.s32.totalorder %s21, 1
        %s271 = scalar_select %p270, %s21, 1
        %p272 = scmp.lt.s32.totalorder %s22, 1
        %s273 = scalar_select %p272, %s22, 1
        %s274 = smul.addr %s271, 2
        %s275 = sadd.s32 %s273, %s274
        %s276 = smul.addr %s275, 4
        %s277 = scalar_lea.vmem %s0, %s276
      $region48: #{tpu_custom_call.1} parent=43 // pred_fallthru
        _
    $region44: #{tpu_custom_call.1} parent=5 // pred_fallthru
      _
    %p278 = scmp.le.s32.totalorder 1, %s14
    %p279 = scmp.lt.s32.totalorder %s14, 5
    %p280 = pnand %p278, %p279
    %p281 = pneg %p280
    // Predicated region
    $region49: #{tpu_custom_call.1} parent=5 // pred_check
      _
    $region50: #{tpu_custom_call.1} parent=5 // pred_check_branch
      %283 = sbr.rel (%p280) target = $region52
    $region51: #{tpu_custom_call.1} parent=5 // pred_region
      %s284 = ssub.s32 %s14, 1
      %p285 = scmp.lt.s32.totalorder %s23, 1
      %s286 = scalar_select %p285, %s23, 1
      %p287 = scmp.lt.s32.totalorder %s24, 1
      %s288 = scalar_select %p287, %s24, 1
      %s289 = smul.addr %s286, 2
      %s290 = sadd.s32 %s288, %s289
      %s291 = smul.addr %s290, 4
      %s292 = scalar_lea.vmem %s0, %s291
      %p293 = pneg %p54
      %p294 = pneg %p51
      %p295 = pneg %p75
      %p296 = pneg %p72
      %p297 = pneg %p96
      %p298 = pneg %p93
      %p299 = pneg %p117
      %p300 = pneg %p114
      %p301 = pneg %p138
      %p302 = pneg %p135
      %p303 = pneg %p159
      %p304 = pneg %p156
      %p305 = pneg %p180
      %p306 = pneg %p177
      %p307 = pneg %p201
      %p308 = pneg %p198
      %p309 = pneg %p227
      %p310 = pneg %p224
      %p311 = scmp.lt.s32.totalorder %s23, 1
      %s312 = scalar_select %p311, %s23, 1
      %s313 = smul.addr %s312, 3
      %s314 = smul.addr %s313, 8
      %s315 = scalar_lea.vmem %s8, %s314
      %p316 = scmp.lt.s32.totalorder %s23, 1
      %s317 = scalar_select %p316, %s23, 1
      %p318 = scmp.lt.s32.totalorder %s24, 1
      %s319 = scalar_select %p318, %s24, 1
      %s320 = smul.addr %s317, 2
      %s321 = sadd.s32 %s319, %s320
      %s322 = smul.addr %s321, 4
      %s323 = scalar_lea.vmem %s0, %s322
      %p324 = scmp.lt.s32.totalorder %s23, 1
      %s325 = scalar_select %p324, %s23, 1
      %s326 = smul.addr %s325, 3
      %s327 = smul.addr %s326, 8
      %s328 = scalar_lea.vmem %s8, %s327
      %p330 = scmp.eq.s32.totalorder %s24, 0
      // Predicated region
      $region53: #{tpu_custom_call.1} parent=51 // pred_check
        %p331 = pneg %p330
      $region54: #{tpu_custom_call.1} parent=51 // pred_check_branch
        %333 = sbr.rel (%p331) target = $region56
      $region55: #{tpu_custom_call.1} parent=51 // pred_region
        %vm334 = vcmask 31744
        %335 = vst.msk [vmem:[%s328] sm:$0xff] %vm334, 0.0
        %336 = vst.msk [vmem:[%s328 + $0x8] sm:$0xff] %vm334, 0.0
        %337 = vst.msk [vmem:[%s328 + $0x10] sm:$0xff] %vm334, 0.0
      $region56: #{tpu_custom_call.1} parent=51 // pred_fallthru
        _
      %v338 = vld [vmem:[%s323] sm:$0xf]
      %v339 = vld [vmem:[%s1] sm:$0xf]
      %v340 = vld [vmem:[%s1 + $0x4] sm:$0xf]
      %v341 = vld [vmem:[%s1 + $0x8] sm:$0xf]
      %v342 = vld [vmem:[%s1 + $0xc] sm:$0xf]
      %v343 = vld [vmem:[%s2] sm:$0x1]
      %v345 = vperm.slane %v343, 0
      %v351 = vunpack.c.l.b16 %v339
      %v352 = vunpack.c.l.b16 %v340
      %v353 = vunpack.c.l.b16 %v341
      %v354 = vunpack.c.l.b16 %v342
      %v355 = vpack.c.b16 %v352, %v351
      %v356 = vpack.c.b16 %v354, %v353
      %vm359 = vcmask 261120
      %v361 = vsel %vm359, %v338, 0
      %363 = vmatpush.bf16.msra.mxu0 0
      %364 = vmatpush.bf16.msra.mxu0 0
      %365 = vmatpush.bf16.msra.mxu0 0
      %366 = vmatpush.bf16.msra.mxu0 0
      %367 = vmatpush.bf16.msra.mxu0 0
      %368 = vmatpush.bf16.msra.mxu0 0
      %369 = vmatpush.bf16.msra.mxu0 %v356
      %370 = vmatpush.bf16.msra.mxu0 %v355
      %371 = vmatmul.bf16.gmra.mxu0 %v361
      %v372 = vpop.f32.mrf.mxu0
      %v373 = vadd.f32 %v345, %v372
      %v374 = vpop.f32.mrf.mxu0
      %375 = vdwg.mxu0
      %v376 = vld [vmem:[%s3] sm:$0xf]
      %v377 = vld [vmem:[%s3 + $0x4] sm:$0xf]
      %v378 = vld [vmem:[%s3 + $0x8] sm:$0xf]
      %v379 = vld [vmem:[%s3 + $0xc] sm:$0xf]
      %v380 = vld [vmem:[%s4] sm:$0x1]
      %v382 = vperm.slane %v380, 0
      %v388 = vunpack.c.l.b16 %v376
      %v389 = vunpack.c.l.b16 %v377
      %v390 = vunpack.c.l.b16 %v378
      %v391 = vunpack.c.l.b16 %v379
      %v392 = vpack.c.b16 %v389, %v388
      %v393 = vpack.c.b16 %v391, %v390
      %396 = vmatpush.bf16.msra.mxu0 0
      %397 = vmatpush.bf16.msra.mxu0 0
      %398 = vmatpush.bf16.msra.mxu0 0
      %399 = vmatpush.bf16.msra.mxu0 0
      %400 = vmatpush.bf16.msra.mxu0 0
      %401 = vmatpush.bf16.msra.mxu0 0
      %402 = vmatpush.bf16.msra.mxu0 %v393
      %403 = vmatpush.bf16.msra.mxu0 %v392
      %404 = vmatmul.bf16.gmra.mxu0 %v361
      %v405 = vpop.f32.mrf.mxu0
      %v406 = vadd.f32 %v382, %v405
      %v407 = vpop.f32.mrf.mxu0
      %408 = vdwg.mxu0
      %v409 = vmul.f32 %v373, 1.442695
      %v410 = vpow.pop %v409
      %v411 = vmin.f32 %v410, 100.0
      %v412 = vlaneseq
      %v413 = vshrl.u32 %v412, 7
      %s414 = smul.u32 %s24, 8
      %v415 = vstv %s414
      %v416 = vadd.s32 %v413, %v415
      %vm417 = vcmp.lt.s32.totalorder %v416, 12
      %v418 = vsel %vm417, 1, 0
      %vm419 = vcmp.eq.s32.totalorder %v418, 1
      %v420 = vsel %vm419, %v411, 0.0
      %v421 = vand.u32 2147483647, %v406
      %vm422 = vcmp.le.f32.partialorder %v421, 0.7853982
      %vm423 = vcmp.lt.s32.totalorder %v406, 0
      %v424 = vand.u32 %v406, 2139095040
      %v425 = vshrl.u32 %v424, 23
      %v426 = vsub.s32 %v425, 127
      %v427 = vand.u32 2147483647, %v406
      %v428 = vand.u32 %v427, 8388607
      %v429 = vor.u32 %v428, 8388608
      %v430 = vsub.s32 0, %v429
      %v431 = vadd.s32 %v426, 1
      %vm432 = vcmp.gt.s32.totalorder %v431, 0
      %v433 = vsel %vm432, %v431, 0
      %v434 = vshrl.u32 %v433, 5
      %v435 = vand.u32 %v433, 31
      %v436 = vsub.s32 32, %v435
      %v437 = vshrl.u32 683565275, %v436
      %v438 = vshll.u32 683565275, %v435
      %v439 = vshrl.u32 2475754826, %v436
      %v440 = vor.u32 %v438, %v439
      %v441 = vshll.u32 2475754826, %v435
      %v442 = vshrl.u32 2131351028, %v436
      %v443 = vor.u32 %v441, %v442
      %v444 = vshll.u32 2131351028, %v435
      %v445 = vshrl.u32 2102212464, %v436
      %v446 = vor.u32 %v444, %v445
      %v447 = vshll.u32 2102212464, %v435
      %v448 = vshrl.u32 920167782, %v436
      %v449 = vor.u32 %v447, %v448
      %v450 = vshll.u32 920167782, %v435
      %v451 = vshrl.u32 1326507024, %v436
      %v452 = vor.u32 %v450, %v451
      %vm453 = vcmp.lt.s32.totalorder %v434, 1
      %vm454 = vcmp.lt.s32.totalorder %v434, 2
      %vm455 = vcmp.lt.s32.totalorder %v434, 3
      %vm456 = vcmp.lt.s32.totalorder %v434, 4
      %v457 = vsel %vm453, %v437, %v440
      %v458 = vsel %vm456, %v446, 2102212464
      %v459 = vsel %vm455, %v443, %v458
      %v460 = vsel %vm454, %v457, %v459
      %v461 = vsel %vm453, %v440, %v443
      %v462 = vsel %vm456, %v449, 920167782
      %v463 = vsel %vm455, %v446, %v462
      %v464 = vsel %vm454, %v461, %v463
      %v465 = vsel %vm453, %v443, %v446
      %v466 = vsel %vm456, %v452, 1326507024
      %v467 = vsel %vm455, %v449, %v466
      %v468 = vsel %vm454, %v465, %v467
      %v469 = vshll.u32 %v429, 8
      %v470 = vand.u32 %v469, 65535
      %v471 = vshrl.u32 %v469, 16
      %v472 = vand.u32 %v468, 65535
      %v473 = vshrl.u32 %v468, 16
      %v474 = vmul.u32 %v470, %v472
      %v475 = vmul.u32 %v470, %v473
      %v476 = vmul.u32 %v471, %v472
      %v477 = vmul.u32 %v471, %v473
      %v478 = vshll.u32 %v475, 16
      %v479 = vshrl.u32 %v475, 16
      %v480 = vshll.u32 %v476, 16
      %v481 = vshrl.u32 %v476, 16
      %vm482 = vc.u32 %v474, %v478
      %v483 = vsel %vm482, 1, 0
      %v484 = vadd.s32 %v474, %v478
      %v485 = vadd.s32 %v477, %v483
      %vm486 = vc.u32 %v484, %v480
      %v487 = vsel %vm486, 1, 0
      %v488 = vadd.s32 %v484, %v480
      %v489 = vadd.s32 %v485, %v487
      %v490 = vadd.s32 %v489, %v479
      %v491 = vadd.s32 %v490, %v481
      %v492 = vand.u32 %v469, 65535
      %v493 = vshrl.u32 %v469, 16
      %v494 = vand.u32 %v464, 65535
      %v495 = vshrl.u32 %v464, 16
      %v496 = vmul.u32 %v492, %v494
      %v497 = vmul.u32 %v492, %v495
      %v498 = vmul.u32 %v493, %v494
      %v499 = vmul.u32 %v493, %v495
      %v500 = vshll.u32 %v497, 16
      %v501 = vshrl.u32 %v497, 16
      %v502 = vshll.u32 %v498, 16
      %v503 = vshrl.u32 %v498, 16
      %vm504 = vc.u32 %v496, %v500
      %v505 = vsel %vm504, 1, 0
      %v506 = vadd.s32 %v496, %v500
      %v507 = vadd.s32 %v499, %v505
      %vm508 = vc.u32 %v506, %v502
      %v509 = vsel %vm508, 1, 0
      %v510 = vadd.s32 %v506, %v502
      %v511 = vadd.s32 %v507, %v509
      %v512 = vadd.s32 %v511, %v501
      %v513 = vadd.s32 %v512, %v503
      %v514 = vmul.u32 %v469, %v460
      %v515 = vadd.s32 %v491, %v510
      %vm516 = vc.u32 %v491, %v510
      %v517 = vadd.s32 %v513, 1
      %v518 = vsel %vm516, %v517, %v513
      %v519 = vadd.s32 %v514, %v518
      %v520 = vadd.s32 %v519, 536870912
      %v521 = vshrl.u32 %v520, 30
      %v522 = vshll.u32 %v521, 30
      %v523 = vsub.s32 %v519, %v522
      %vm524 = vcmp.lt.s32.totalorder %v523, 0
      %v525 = vsub.s32 0, %v523
      %v526 = vsel %vm524, %v525, %v523
      %v527 = vclz %v526
      %v528 = vsub.s32 %v527, 2
      %vm529 = vcmp.gt.s32.totalorder 0, %v528
      %v530 = vsel %vm529, 0, %v528
      %v531 = vsub.s32 32, %v530
      %v532 = vshll.u32 %v523, %v530
      %v533 = vshrl.u32 %v515, %v531
      %v534 = vor.u32 %v532, %v533
      %v535 = vsub.s32 4294967266, %v530
      %v536 = vadd.s32 %v535, 127
      %v537 = vshll.u32 %v536, 23
      %v538 = vor.u32 4788187, %v537
      %v539 = vand.u32 2147483647, %v538
      %v541 = vcvt.s32.f32 %v534
      %v542 = vmul.f32 %v541, %v539
      %v543 = vxor.u32 %v542, 2147483648
      %v544 = vsel %vm423, %v543, %v542
      %v545 = vsub.s32 4, %v521
      %v546 = vsel %vm423, %v545, %v521
      %v547 = vsel %vm422, %v406, %v544
      %v548 = vsel %vm422, 0, %v546
      %v549 = vmul.f32 %v547, %v547
      %v550 = vmul.f32 %v549, -0.001358992
      %v551 = vadd.f32 %v550, 0.041655596
      %v552 = vmul.f32 %v549, %v551
      %v553 = vadd.f32 %v552, -0.4999988
      %v554 = vmul.f32 %v549, %v553
      %v555 = vadd.f32 1.0, %v554
      %v556 = vmul.f32 %v547, %v547
      %v557 = vmul.f32 %v556, -0.00019511016
      %v558 = vadd.f32 %v557, 0.008332121
      %v559 = vmul.f32 %v556, %v558
      %v560 = vadd.f32 %v559, -0.16666654
      %v561 = vmul.f32 %v556, %v560
      %v562 = vadd.f32 %v561, 1.0
      %v563 = vmul.f32 %v562, %v547
      %vm564 = vweird.f32 %v406
      %v565 = vand.u32 %v548, 3
      %vm566 = vcmp.lt.s32.totalorder %v565, 2
      %vm567 = vcmp.eq.s32.totalorder %v565, 0
      %v568 = vxor.u32 %v563, 2147483648
      %v569 = vsel %vm567, %v555, %v568
      %vm570 = vcmp.eq.s32.totalorder %v565, 2
      %v571 = vxor.u32 %v555, 2147483648
      %v572 = vsel %vm570, %v571, %v563
      %v573 = vsel %vm566, %v569, %v572
      %v574 = vsel %vm564, nan, %v573
      %v575 = vmul.f32 %v420, %v574
      %v576 = vpack.c.bf16 %v575, %v575
      %v577 = vand.u32 2147483647, %v406
      %vm578 = vcmp.le.f32.partialorder %v577, 0.7853982
      %vm579 = vcmp.lt.s32.totalorder %v406, 0
      %v580 = vand.u32 %v406, 2139095040
      %v581 = vshrl.u32 %v580, 23
      %v582 = vsub.s32 %v581, 127
      %v583 = vand.u32 2147483647, %v406
      %v584 = vand.u32 %v583, 8388607
      %v585 = vor.u32 %v584, 8388608
      %v586 = vsub.s32 0, %v585
      %v587 = vadd.s32 %v582, 1
      %vm588 = vcmp.gt.s32.totalorder %v587, 0
      %v589 = vsel %vm588, %v587, 0
      %v590 = vshrl.u32 %v589, 5
      %v591 = vand.u32 %v589, 31
      %v592 = vsub.s32 32, %v591
      %v593 = vshrl.u32 683565275, %v592
      %v594 = vshll.u32 683565275, %v591
      %v595 = vshrl.u32 2475754826, %v592
      %v596 = vor.u32 %v594, %v595
      %v597 = vshll.u32 2475754826, %v591
      %v598 = vshrl.u32 2131351028, %v592
      %v599 = vor.u32 %v597, %v598
      %v600 = vshll.u32 2131351028, %v591
      %v601 = vshrl.u32 2102212464, %v592
      %v602 = vor.u32 %v600, %v601
      %v603 = vshll.u32 2102212464, %v591
      %v604 = vshrl.u32 920167782, %v592
      %v605 = vor.u32 %v603, %v604
      %v606 = vshll.u32 920167782, %v591
      %v607 = vshrl.u32 1326507024, %v592
      %v608 = vor.u32 %v606, %v607
      %vm609 = vcmp.lt.s32.totalorder %v590, 1
      %vm610 = vcmp.lt.s32.totalorder %v590, 2
      %vm611 = vcmp.lt.s32.totalorder %v590, 3
      %vm612 = vcmp.lt.s32.totalorder %v590, 4
      %v613 = vsel %vm609, %v593, %v596
      %v614 = vsel %vm612, %v602, 2102212464
      %v615 = vsel %vm611, %v599, %v614
      %v616 = vsel %vm610, %v613, %v615
      %v617 = vsel %vm609, %v596, %v599
      %v618 = vsel %vm612, %v605, 920167782
      %v619 = vsel %vm611, %v602, %v618
      %v620 = vsel %vm610, %v617, %v619
      %v621 = vsel %vm609, %v599, %v602
      %v622 = vsel %vm612, %v608, 1326507024
      %v623 = vsel %vm611, %v605, %v622
      %v624 = vsel %vm610, %v621, %v623
      %v625 = vshll.u32 %v585, 8
      %v626 = vand.u32 %v625, 65535
      %v627 = vshrl.u32 %v625, 16
      %v628 = vand.u32 %v624, 65535
      %v629 = vshrl.u32 %v624, 16
      %v630 = vmul.u32 %v626, %v628
      %v631 = vmul.u32 %v626, %v629
      %v632 = vmul.u32 %v627, %v628
      %v633 = vmul.u32 %v627, %v629
      %v634 = vshll.u32 %v631, 16
      %v635 = vshrl.u32 %v631, 16
      %v636 = vshll.u32 %v632, 16
      %v637 = vshrl.u32 %v632, 16
      %vm638 = vc.u32 %v630, %v634
      %v639 = vsel %vm638, 1, 0
      %v640 = vadd.s32 %v630, %v634
      %v641 = vadd.s32 %v633, %v639
      %vm642 = vc.u32 %v640, %v636
      %v643 = vsel %vm642, 1, 0
      %v644 = vadd.s32 %v640, %v636
      %v645 = vadd.s32 %v641, %v643
      %v646 = vadd.s32 %v645, %v635
      %v647 = vadd.s32 %v646, %v637
      %v648 = vand.u32 %v625, 65535
      %v649 = vshrl.u32 %v625, 16
      %v650 = vand.u32 %v620, 65535
      %v651 = vshrl.u32 %v620, 16
      %v652 = vmul.u32 %v648, %v650
      %v653 = vmul.u32 %v648, %v651
      %v654 = vmul.u32 %v649, %v650
      %v655 = vmul.u32 %v649, %v651
      %v656 = vshll.u32 %v653, 16
      %v657 = vshrl.u32 %v653, 16
      %v658 = vshll.u32 %v654, 16
      %v659 = vshrl.u32 %v654, 16
      %vm660 = vc.u32 %v652, %v656
      %v661 = vsel %vm660, 1, 0
      %v662 = vadd.s32 %v652, %v656
      %v663 = vadd.s32 %v655, %v661
      %vm664 = vc.u32 %v662, %v658
      %v665 = vsel %vm664, 1, 0
      %v666 = vadd.s32 %v662, %v658
      %v667 = vadd.s32 %v663, %v665
      %v668 = vadd.s32 %v667, %v657
      %v669 = vadd.s32 %v668, %v659
      %v670 = vmul.u32 %v625, %v616
      %v671 = vadd.s32 %v647, %v666
      %vm672 = vc.u32 %v647, %v666
      %v673 = vadd.s32 %v669, 1
      %v674 = vsel %vm672, %v673, %v669
      %v675 = vadd.s32 %v670, %v674
      %v676 = vadd.s32 %v675, 536870912
      %v677 = vshrl.u32 %v676, 30
      %v678 = vshll.u32 %v677, 30
      %v679 = vsub.s32 %v675, %v678
      %vm680 = vcmp.lt.s32.totalorder %v679, 0
      %v681 = vsub.s32 0, %v679
      %v682 = vsel %vm680, %v681, %v679
      %v683 = vclz %v682
      %v684 = vsub.s32 %v683, 2
      %vm685 = vcmp.gt.s32.totalorder 0, %v684
      %v686 = vsel %vm685, 0, %v684
      %v687 = vsub.s32 32, %v686
      %v688 = vshll.u32 %v679, %v686
      %v689 = vshrl.u32 %v671, %v687
      %v690 = vor.u32 %v688, %v689
      %v691 = vsub.s32 4294967266, %v686
      %v692 = vadd.s32 %v691, 127
      %v693 = vshll.u32 %v692, 23
      %v694 = vor.u32 4788187, %v693
      %v695 = vand.u32 2147483647, %v694
      %v697 = vcvt.s32.f32 %v690
      %v698 = vmul.f32 %v697, %v695
      %v699 = vxor.u32 %v698, 2147483648
      %v700 = vsel %vm579, %v699, %v698
      %v701 = vsub.s32 4, %v677
      %v702 = vsel %vm579, %v701, %v677
      %v703 = vsel %vm578, %v406, %v700
      %v704 = vsel %vm578, 0, %v702
      %v705 = vmul.f32 %v703, %v703
      %v706 = vmul.f32 %v705, -0.001358992
      %v707 = vadd.f32 %v706, 0.041655596
      %v708 = vmul.f32 %v705, %v707
      %v709 = vadd.f32 %v708, -0.4999988
      %v710 = vmul.f32 %v705, %v709
      %v711 = vadd.f32 1.0, %v710
      %v712 = vmul.f32 %v703, %v703
      %v713 = vmul.f32 %v712, -0.00019511016
      %v714 = vadd.f32 %v713, 0.008332121
      %v715 = vmul.f32 %v712, %v714
      %v716 = vadd.f32 %v715, -0.16666654
      %v717 = vmul.f32 %v712, %v716
      %v718 = vadd.f32 %v717, 1.0
      %v719 = vmul.f32 %v718, %v703
      %vm720 = vweird.f32 %v406
      %v721 = vadd.s32 %v704, 3
      %v722 = vand.u32 %v721, 3
      %vm723 = vcmp.lt.s32.totalorder %v722, 2
      %vm724 = vcmp.eq.s32.totalorder %v722, 0
      %v725 = vxor.u32 %v719, 2147483648
      %v726 = vsel %vm724, %v711, %v725
      %vm727 = vcmp.eq.s32.totalorder %v722, 2
      %v728 = vxor.u32 %v711, 2147483648
      %v729 = vsel %vm727, %v728, %v719
      %v730 = vsel %vm723, %v726, %v729
      %v731 = vsel %vm720, nan, %v730
      %v732 = vmul.f32 %v420, %v731
      %v733 = vpack.c.bf16 %v732, %v732
      %v734 = vld [vmem:[%s5] sm:$0xf]
      %v735 = vld [vmem:[%s5 + $0x4] sm:$0x1]
      %v736 = vld [vmem:[%s6] sm:$0xf]
      %v737 = vld [vmem:[%s6 + $0x4] sm:$0x1]
      %v740 = vunpack.c.l.b16 %v736
      %v741 = vunpack.c.l.b16 %v737
      %v742 = vpack.c.b16 %v741, %v740
      %vm743 = vcmask 72704
      %v745 = vsel %vm743, %v733, 0
      %vm747 = vcmask 1043456
      %vm748 = vcmask 1044480
      %v749 = vsel %vm747, 4294967295, 65535
      %v750 = vsel %vm748, %v749, 0
      %v752 = vand.u32 %v742, %v750
      %754 = vmatpush.bf16.msra.mxu0 0
      %755 = vmatpush.bf16.msra.mxu0 0
      %756 = vmatpush.bf16.msra.mxu0 0
      %757 = vmatpush.bf16.msra.mxu0 0
      %758 = vmatpush.bf16.msra.mxu0 0
      %759 = vmatpush.bf16.msra.mxu0 0
      %760 = vmatpush.bf16.msra.mxu0 0
      %761 = vmatpush.bf16.msra.mxu0 %v752
      %762 = vmatmul.bf16.gmra.mxu0 %v745
      %v763 = vpop.f32.mrf.mxu0
      %v764 = vadd.f32 0.0, %v763
      %v765 = vpop.f32.mrf.mxu0
      %766 = vdwg.mxu0
      %v769 = vunpack.c.l.b16 %v734
      %v770 = vunpack.c.l.b16 %v735
      %v771 = vpack.c.b16 %v770, %v769
      %v773 = vsel %vm743, %v576, 0
      %v776 = vand.u32 %v771, %v750
      %778 = vmatpush.bf16.msra.mxu0 0
      %779 = vmatpush.bf16.msra.mxu0 0
      %780 = vmatpush.bf16.msra.mxu0 0
      %781 = vmatpush.bf16.msra.mxu0 0
      %782 = vmatpush.bf16.msra.mxu0 0
      %783 = vmatpush.bf16.msra.mxu0 0
      %784 = vmatpush.bf16.msra.mxu0 0
      %785 = vmatpush.bf16.msra.mxu0 %v776
      %786 = vmatmul.bf16.gmra.mxu0 %v773
      %v787 = vpop.f32.mrf.mxu0
      %v788 = vadd.f32 %v764, %v787
      %v789 = vpop.f32.mrf.mxu0
      %790 = vdwg.mxu0
      %vm791 = vcmask 31744
      %792 = vst.msk [vmem:[#allocation2] sm:$0xff] %vm791, 0.0
      %793 = vst.msk [vmem:[#allocation2 + $0x8] sm:$0xff] %vm791, 0.0
      %v794 = vld [vmem:[#allocation2] sm:$0xff]
      %v795 = vadd.f32 %v794, %v788
      %796 = vst.msk [vmem:[#allocation2] sm:$0xff] %vm791, %v795
      %v797 = vld [vmem:[#allocation2 + $0x1] sm:$0xff]
      %799 = vrot.lane.b32.xlu0 %v788, 124
      %v800 = vpop.permute.xlu0 %799
      %v802 = vadd.f32 %v797, %v800
      %803 = vst.msk [vmem:[#allocation2 + $0x1] sm:$0xff] %vm791, %v802
      %v804 = vld [vmem:[#allocation2 + $0x2] sm:$0xff]
      %805 = vrot.lane.b32.xlu0 %v788, 120
      %v806 = vpop.permute.xlu0 %805
      %v808 = vadd.f32 %v804, %v806
      %809 = vst.msk [vmem:[#allocation2 + $0x2] sm:$0xff] %vm791, %v808
      %v810 = vld [vmem:[#allocation2 + $0x3] sm:$0xff]
      %811 = vrot.lane.b32.xlu0 %v788, 116
      %v812 = vpop.permute.xlu0 %811
      %v814 = vadd.f32 %v810, %v812
      %815 = vst.msk [vmem:[#allocation2 + $0x3] sm:$0xff] %vm791, %v814
      %s816 = scalar_lea.vmem %s328, %s414
      %v817 = vld [vmem:[%s816] sm:$0xff]
      %v818 = vld [vmem:[%s816 + $0x8] sm:$0xff]
      %v819 = vld [vmem:[#allocation2] sm:$0xff]
      %v820 = vld [vmem:[#allocation2 + $0x8] sm:$0xff]
      %v821 = vadd.f32 %v817, %v819
      %v822 = vadd.f32 %v818, %v820
      %823 = vst.msk [vmem:[%s816] sm:$0xff] %vm791, %v821
      %824 = vst.msk [vmem:[%s816 + $0x8] sm:$0xff] %vm791, %v822
      %p825 = scmp.eq.s32.totalorder %s24, 1
      // Predicated region
      $region57: #{tpu_custom_call.1} parent=51 // pred_check
        %p826 = pneg %p825
      $region58: #{tpu_custom_call.1} parent=51 // pred_check_branch
        %828 = sbr.rel (%p826) target = $region60
      $region59: #{tpu_custom_call.1} parent=51 // pred_region
        %v829 = vld [vmem:[%s328] sm:$0xff]
        %v830 = vld [vmem:[%s328 + $0x8] sm:$0xff]
        %v831 = vld [vmem:[%s328 + $0x10] sm:$0xff]
        %v832 = vld [vmem:[%s7] sm:$0xff]
        %v833 = vld [vmem:[%s7 + $0x8] sm:$0xff]
        %v834 = vld [vmem:[%s7 + $0x10] sm:$0xff]
        %v835 = vmul.f32 %v829, %v832
        %v836 = vmul.f32 %v830, %v833
        %v837 = vmul.f32 %v831, %v834
        %838 = vst.msk [vmem:[%s328] sm:$0xff] %vm791, %v835
        %839 = vst.msk [vmem:[%s328 + $0x8] sm:$0xff] %vm791, %v836
        %840 = vst.msk [vmem:[%s328 + $0x10] sm:$0xff] %vm791, %v837
      $region60: #{tpu_custom_call.1} parent=51 // pred_fallthru
        _
      %p841 = scmp.lt.s32.totalorder %s23, 1
      %s842 = scalar_select %p841, %s23, 1
      %s843 = smul.addr %s842, 3
      %s844 = smul.addr %s843, 8
      %s845 = scalar_lea.vmem %s8, %s844
      // Predicated region
      $region61: #{tpu_custom_call.1} parent=51 // pred_check
        %p846 = pneg %p224
      $region62: #{tpu_custom_call.1} parent=51 // pred_check_branch
        %848 = sbr.rel (%p846) target = $region64
      $region63: #{tpu_custom_call.1} parent=51 // pred_region
        _
      $region64: #{tpu_custom_call.1} parent=51 // pred_fallthru
        _
    $region52: #{tpu_custom_call.1} parent=5 // pred_fallthru
      _
    %p849 = scmp.le.s32.totalorder 2, %s14
    // Predicated region
    $region65: #{tpu_custom_call.1} parent=5 // pred_check
      %p850 = pneg %p849
    $region66: #{tpu_custom_call.1} parent=5 // pred_check_branch
      %852 = sbr.rel (%p850) target = $region68
    $region67: #{tpu_custom_call.1} parent=5 // pred_region
      %s853 = ssub.s32 %s14, 2
      // Predicated region
      $region69: #{tpu_custom_call.1} parent=67 // pred_check
        %p854 = pneg %p230
      $region70: #{tpu_custom_call.1} parent=67 // pred_check_branch
        %856 = sbr.rel (%p854) target = $region72
      $region71: #{tpu_custom_call.1} parent=67 // pred_region
        %p857 = scmp.lt.s32.totalorder %s25, 1
        %s858 = scalar_select %p857, %s25, 1
        %s859 = smul.addr %s858, 3
        %s860 = smul.addr %s859, 8
        %s861 = scalar_lea.vmem %s8, %s860
      $region72: #{tpu_custom_call.1} parent=67 // pred_fallthru
        _
    $region68: #{tpu_custom_call.1} parent=5 // pred_fallthru
      _
  $region6: #{tpu_custom_call.1} parent=0 // loop_footer
    %s18 = sadd.s32 1, %s14
  $region7: #{tpu_custom_call.1} parent=0 // loop_footer_branch
    %13 = sbr.rel target = $region3
  $region8: #{tpu_custom_call.1} parent=0 // loop_exit
    _

</llo_original>
